<compile_context>
chip_gen: v7x
topology: tpu7x:2x2x1
jax: 0.10.0
libtpu: 0.0.40
codegen_flags: <defaults>
</compile_context>

<pallas_src>
import functools

import jax
import jax.numpy as jnp
from jax.experimental import pallas as pl
from jax.experimental.pallas import tpu as pltpu


IN_FEATURES = 512      # 512 * block.expansion, expansion = 1
NUM_CLASSES = 10
OUT_PAD = 128          # lane-dense padded weight width for the MXU


def _linear_kernel(x_ref, w_ref, b_ref, o_ref, *, out_dim):
    # One MXU matmul per batch tile, f32 accumulation.  Only the out_dim real
    # columns are stored (HBM writeback is 40 B/row, not 512 B/row).
    acc = jnp.dot(x_ref[...], w_ref[...], preferred_element_type=jnp.float32)
    o_ref[...] = (acc[:, :out_dim] + b_ref[:, :out_dim]).astype(o_ref.dtype)


def prepare_params(weight, bias):
    """One-time parameter layout prep (hoisted out of the per-call hot path).

    weight: (OUT, IN) torch nn.Linear layout -> lane-dense (IN, OUT_PAD).
    bias:   (OUT,)                            -> (1, OUT_PAD).
    """
    out_dim, in_dim = weight.shape
    w_pad = jnp.zeros((in_dim, OUT_PAD), dtype=weight.dtype).at[:, :out_dim].set(weight.T)
    b_pad = jnp.zeros((1, OUT_PAD), dtype=bias.dtype).at[0, :out_dim].set(bias)
    return w_pad, b_pad


def _choose_tile_b(batch, tile_b):
    # Keep >= 2 grid tiles so v7x's two TensorCores both get work, and force
    # the tile to a multiple of 8 (sublane constraint).
    tb = min(tile_b, batch, -(-batch // 2))
    tb = max(8, (tb // 8) * 8)
    return tb


def resnet_only_linear(x, w_pad, b_pad, *, num_classes=NUM_CLASSES,
                       tile_b=2048, min_pallas_batch=128):
    """Forward pass of ResNetOnlyLinear.

    x:     (B, IN) float32 activations.
    w_pad: (IN, OUT_PAD) float32 lane-dense weight from prepare_params().
    b_pad: (1, OUT_PAD) float32 padded bias from prepare_params().
    returns (B, num_classes) float32.
    """
    batch, in_dim = x.shape

    if batch < min_pallas_batch:
        # Small-batch bypass: custom-call launch overhead dominates and the
        # fused HLO linear is already at the HBM roofline.
        return x @ w_pad[:, :num_classes] + b_pad[0, :num_classes]

    tb = _choose_tile_b(batch, tile_b)
    n_tiles = pl.cdiv(batch, tb)      # ragged last block handled by Pallas

    cost = pl.CostEstimate(
        flops=2 * batch * in_dim * OUT_PAD,
        transcendentals=0,
        bytes_accessed=(batch * in_dim * 4 + in_dim * OUT_PAD * 4
                        + OUT_PAD * 4 + batch * num_classes * 4),
    )

    kernel = functools.partial(_linear_kernel, out_dim=num_classes)

    return pl.pallas_call(
        kernel,
        out_shape=jax.ShapeDtypeStruct((batch, num_classes), x.dtype),
        grid_spec=pl.GridSpec(
            grid=(n_tiles,),
            in_specs=[
                pl.BlockSpec((tb, in_dim), lambda i: (i, 0)),      # x tile (pipelined)
                pl.BlockSpec((in_dim, OUT_PAD), lambda i: (0, 0)),  # weight (resident)
                pl.BlockSpec((1, OUT_PAD), lambda i: (0, 0)),       # bias   (resident)
            ],
            out_specs=pl.BlockSpec((tb, num_classes), lambda i: (i, 0)),
        ),
        compiler_params=pltpu.CompilerParams(
            dimension_semantics=("parallel",),   # v7x: shard batch over 2 TCs
            vmem_limit_bytes=32 * 1024 * 1024,
        ),
        cost_estimate=cost,
    )(x, w_pad, b_pad)


if __name__ == "__main__":
    key = jax.random.PRNGKey(0)
    k_x1, k_x2, k_w, k_b = jax.random.split(key, 4)

    # torch nn.Linear init-style synthetic params: weight (out, in), bias (out,).
    bound = 1.0 / jnp.sqrt(jnp.float32(IN_FEATURES))
    weight = jax.random.uniform(k_w, (NUM_CLASSES, IN_FEATURES),
                                minval=-bound, maxval=bound, dtype=jnp.float32)
    bias = jax.random.uniform(k_b, (NUM_CLASSES,),
                              minval=-bound, maxval=bound, dtype=jnp.float32)
    w_pad, b_pad = prepare_params(weight, bias)      # one-time layout prep

    # (1) Pallas path: batch above the bypass threshold and NOT a tile multiple,
    #     so the ragged last block is exercised (tb=96, grid=3 for B=200).
    B1 = 200
    x1 = jax.random.normal(k_x1, (B1, IN_FEATURES), dtype=jnp.float32)
    out1 = jax.block_until_ready(resnet_only_linear(x1, w_pad, b_pad))
    ref1 = x1 @ weight.T + bias[None, :]
    assert out1.shape == (B1, NUM_CLASSES), out1.shape
    assert jnp.allclose(out1, ref1, atol=1e-4, rtol=1e-4)

    # (2) Small-batch bypass path (B=8), matching the module's tiny-batch use.
    B2 = 8
    x2 = jax.random.normal(k_x2, (B2, IN_FEATURES), dtype=jnp.float32)
    out2 = jax.block_until_ready(resnet_only_linear(x2, w_pad, b_pad))
    ref2 = x2 @ weight.T + bias[None, :]
    assert out2.shape == (B2, NUM_CLASSES), out2.shape
    assert jnp.allclose(out2, ref2, atol=1e-4, rtol=1e-4)

    print("KERNEL_OK")
</pallas_src>

<mosaic_0001>
module attributes {stable_mosaic.version = 11 : i64} {
  func.func @_linear_kernel(%arg0: i32, %arg1: memref<96x512xf32, #tpu.memory_space<vmem>>, %arg2: memref<512x128xf32, #tpu.memory_space<vmem>>, %arg3: memref<1x128xf32, #tpu.memory_space<vmem>>, %arg4: memref<96x10xf32, #tpu.memory_space<vmem>>) attributes {dimension_semantics = [#tpu.dimension_semantics<parallel>], iteration_bounds = array<i64: 3>, scalar_prefetch = 0 : i64, scratch_operands = 0 : i64, tpu.core_type = #tpu.core_type<tc>, window_params = [{transform_indices = @transform_0, window_bounds = array<i64: 96, 512>}, {pipeline_mode = #tpu.pipeline_mode<synchronous>, transform_indices = @transform_1, window_bounds = array<i64: 512, 128>}, {pipeline_mode = #tpu.pipeline_mode<synchronous>, transform_indices = @transform_2, window_bounds = array<i64: 1, 128>}, {transform_indices = @transform_3, window_bounds = array<i64: 96, 10>}]} {
    %c0 = arith.constant 0 : index
    %c0_0 = arith.constant 0 : index
    %0 = vector.load %arg1[%c0, %c0_0] : memref<96x512xf32, #tpu.memory_space<vmem>>, vector<96x512xf32>
    %c0_1 = arith.constant 0 : index
    %c0_2 = arith.constant 0 : index
    %1 = vector.load %arg2[%c0_1, %c0_2] : memref<512x128xf32, #tpu.memory_space<vmem>>, vector<512x128xf32>
    %cst = arith.constant dense<0.000000e+00> : vector<96x128xf32>
    %2 = tpu.matmul %0, %1, %cst {dimension_numbers = #tpu.dot_dimension_numbers<[1], [0], [0], [1], [0, 0, 1, 1], [], []>} : vector<96x512xf32>, vector<512x128xf32>, vector<96x128xf32> -> vector<96x128xf32>
    %3 = vector.extract_strided_slice %2 {offsets = [0, 0], sizes = [96, 10], strides = [1, 1]} : vector<96x128xf32> to vector<96x10xf32>
    %c0_3 = arith.constant 0 : index
    %c0_4 = arith.constant 0 : index
    %4 = vector.load %arg3[%c0_3, %c0_4] : memref<1x128xf32, #tpu.memory_space<vmem>>, vector<1x10xf32>
    %5 = vector.broadcast %4 : vector<1x10xf32> to vector<96x10xf32>
    %6 = arith.addf %3, %5 : vector<96x10xf32>
    %c0_5 = arith.constant 0 : index
    %c0_6 = arith.constant 0 : index
    %7 = vector.load %arg4[%c0_5, %c0_6] : memref<96x10xf32, #tpu.memory_space<vmem>>, vector<96x10xf32>
    tpu.vector_store %arg4[%c0_5, %c0_6], %6 {strides = array<i32>} : memref<96x10xf32, #tpu.memory_space<vmem>>, vector<96x10xf32>,
    return
  }
  func.func @transform_0(%arg0: i32) -> (i32, i32) {
    %c0_i32 = arith.constant 0 : i32
    %c0_i32_0 = arith.constant 0 : i32
    return %arg0, %c0_i32 : i32, i32
  }
  func.func @transform_1(%arg0: i32) -> (i32, i32) {
    %c0_i32 = arith.constant 0 : i32
    %c0_i32_0 = arith.constant 0 : i32
    %c0_i32_1 = arith.constant 0 : i32
    return %c0_i32, %c0_i32_0 : i32, i32
  }
  func.func @transform_2(%arg0: i32) -> (i32, i32) {
    %c0_i32 = arith.constant 0 : i32
    %c0_i32_0 = arith.constant 0 : i32
    %c0_i32_1 = arith.constant 0 : i32
    return %c0_i32, %c0_i32_0 : i32, i32
  }
  func.func @transform_3(%arg0: i32) -> (i32, i32) {
    %c0_i32 = arith.constant 0 : i32
    %c0_i32_0 = arith.constant 0 : i32
    return %arg0, %c0_i32 : i32, i32
  }
}

</mosaic_0001>

<llo_original>
// kernel: tpu_custom_call.1
$region0: #{tpu_custom_call.1}
  #allocation0 [shape = 'u32[]', space=smem, size = 0x4, offset = 0x4, fixed_abs, tag = 'smem constant byte address 0x4 - core index']
  #allocation1 [shape = 'u32[144,128]{1,0:T(1,128)}', space=vmem, size = 0x12000, scoped, tag = 'internal scratch']
  %s0 = inlined_call_operand.hbm [shape: f32[200,512], index: 0, kind: input, shape index: {}]
  %s1 = inlined_call_operand.hbm [shape: f32[512,128], index: 1, kind: input, shape index: {}]
  %s2 = inlined_call_operand.vmem [shape: f32[1,128], index: 2, kind: input, shape index: {}]
  %s3 = inlined_call_operand.vmem [shape: f32[200,10], index: 3, kind: output, shape index: {}]
  %s4 = sld [smem:[#allocation0]]
  $region101: #{tpu_custom_call.1} parent=0
    _
  %s6 = ssub.s32 1, %s4
  %s7 = scalar_select 0, %s6, %s4
  $region1: #{tpu_custom_call.1} parent=0
    #allocation2 [shape = 'u8[393216]{0}', space=vmem, size = 0x60000, scoped, tag = 'input window, operand 0']
    #allocation3 [shape = 's32[2]{0}', space=sflag, size = 0x8, scoped, tag = 'scoped memory for tpu_custom_call.1']
    #allocation4 [shape = 'u8[262144]{0}', space=vmem, size = 0x40000, scoped, tag = 'input window, operand 1, single buffered']
    #allocation5 [shape = 's32[1]{0}', space=sflag, size = 0x4, scoped, tag = 'scoped memory for tpu_custom_call.1']
    #allocation6 [shape = 'u8[98304]{0}', space=vmem, size = 0x18000, scoped, tag = 'output window, operand 0']
    %8 = vsyncpa [#allocation3], 0
    %s9 = scalar_lea.sflag [#allocation3], 1
    %10 = vsyncpa %s9, 0
    %11 = vsyncpa [#allocation5], 0
    loop: start=0, step=1, limit=5
    $region2: #{tpu_custom_call.1} parent=1 // loop_pre_header
      _
    $region3: #{tpu_custom_call.1} parent=1 // loop_header
      %s13 = sphi 0, %s17
      %p14 = scmp.ge.s32.totalorder %s13, 5
      %s23 = sphi 0, %s25
      %s26 = sphi 0, %s23
      %s27 = sphi 0, %s26
      %s43 = sphi 0, %s27
      %s47 = sphi 0, %s47
      %s49 = sphi 0, %s47
      %s50 = sphi 0, %s49
      %s64 = sphi 0, %s50
      %s68 = sphi 0, %s68
      %s70 = sphi 0, %s68
      %s71 = sphi 0, %s70
      %s85 = sphi 0, %s71
      %s91 = sphi 0, %s93
      %s94 = sphi 0, %s91
      %s95 = sphi 0, %s94
      %s111 = sphi 0, %s95
    $region4: #{tpu_custom_call.1} parent=1 // loop_header_branch
      %16 = sbr.rel (%p14) target = $region8
    $region5: #{tpu_custom_call.1} parent=1 // loop_body
      %s18 = ssub.s32 %s13, 1
      %s19 = ssub.s32 %s13, 2
      %s20 = sadd.s32 %s13, 1
      %s21 = ssub.s32 %s13, %s20
      %p22 = scmp.eq.s32.totalorder %s21, 0
      %s24 = sadd.s32 %s23, 1
      %s25 = scalar_select %p22, %s23, %s24
      %p28 = pneg %p22
      %p29 = scmp.eq.s32.totalorder %s13, 2
      %p30 = por %p28, %p29
      %p31 = scmp.ne.s32.totalorder %s23, %s26
      %p32 = scmp.eq.s32.totalorder %s13, 0
      %p33 = por %p31, %p32
      %p34 = scmp.ne.s32.totalorder %s23, %s26
      %p35 = scmp.eq.s32.totalorder %s18, 2
      %p36 = por %p34, %p35
      %p37 = scmp.ne.s32.totalorder %s26, %s27
      %p38 = scmp.eq.s32.totalorder %s18, 0
      %p39 = por %p37, %p38
      %p40 = scmp.ne.s32.totalorder %s26, %s27
      %p41 = scmp.eq.s32.totalorder %s19, 2
      %p42 = por %p40, %p41
      %p44 = scmp.ne.s32.totalorder %s27, %s43
      %p45 = scmp.eq.s32.totalorder %s19, 0
      %p46 = por %p44, %p45
      %s48 = sadd.s32 %s47, 1
      %p51 = scmp.eq.s32.totalorder %s13, 2
      %p52 = scmp.ne.s32.totalorder %s47, %s49
      %p53 = scmp.eq.s32.totalorder %s13, 0
      %p54 = por %p52, %p53
      %p55 = scmp.ne.s32.totalorder %s47, %s49
      %p56 = scmp.eq.s32.totalorder %s18, 2
      %p57 = por %p55, %p56
      %p58 = scmp.ne.s32.totalorder %s49, %s50
      %p59 = scmp.eq.s32.totalorder %s18, 0
      %p60 = por %p58, %p59
      %p61 = scmp.ne.s32.totalorder %s49, %s50
      %p62 = scmp.eq.s32.totalorder %s19, 2
      %p63 = por %p61, %p62
      %p65 = scmp.ne.s32.totalorder %s50, %s64
      %p66 = scmp.eq.s32.totalorder %s19, 0
      %p67 = por %p65, %p66
      %s69 = sadd.s32 %s68, 1
      %p72 = scmp.eq.s32.totalorder %s13, 2
      %p73 = scmp.ne.s32.totalorder %s68, %s70
      %p74 = scmp.eq.s32.totalorder %s13, 0
      %p75 = por %p73, %p74
      %p76 = scmp.ne.s32.totalorder %s68, %s70
      %p77 = scmp.eq.s32.totalorder %s18, 2
      %p78 = por %p76, %p77
      %p79 = scmp.ne.s32.totalorder %s70, %s71
      %p80 = scmp.eq.s32.totalorder %s18, 0
      %p81 = por %p79, %p80
      %p82 = scmp.ne.s32.totalorder %s70, %s71
      %p83 = scmp.eq.s32.totalorder %s19, 2
      %p84 = por %p82, %p83
      %p86 = scmp.ne.s32.totalorder %s71, %s85
      %p87 = scmp.eq.s32.totalorder %s19, 0
      %p88 = por %p86, %p87
      %s89 = ssub.s32 %s13, %s20
      %p90 = scmp.eq.s32.totalorder %s89, 0
      %s92 = sadd.s32 %s91, 1
      %s93 = scalar_select %p90, %s91, %s92
      %p96 = pneg %p90
      %p97 = scmp.eq.s32.totalorder %s13, 2
      %p98 = por %p96, %p97
      %p99 = scmp.ne.s32.totalorder %s91, %s94
      %p100 = scmp.eq.s32.totalorder %s13, 0
      %p101 = por %p99, %p100
      %p102 = scmp.ne.s32.totalorder %s91, %s94
      %p103 = scmp.eq.s32.totalorder %s18, 2
      %p104 = por %p102, %p103
      %p105 = scmp.ne.s32.totalorder %s94, %s95
      %p106 = scmp.eq.s32.totalorder %s18, 0
      %p107 = por %p105, %p106
      %p108 = scmp.ne.s32.totalorder %s94, %s95
      %p109 = scmp.eq.s32.totalorder %s19, 2
      %p110 = por %p108, %p109
      %p112 = scmp.ne.s32.totalorder %s95, %s111
      %p113 = scmp.eq.s32.totalorder %s19, 0
      %p114 = por %p112, %p113
      %p115 = scmp.le.s32.totalorder 1, %s13
      %p116 = scmp.lt.s32.totalorder %s13, 4
      %p117 = pnand %p115, %p116
      %p118 = pneg %p117
      // Predicated region
      $region9: #{tpu_custom_call.1} parent=5 // pred_check
        _
      $region10: #{tpu_custom_call.1} parent=5 // pred_check_branch
        %120 = sbr.rel (%p117) target = $region12
      $region11: #{tpu_custom_call.1} parent=5 // pred_region
        %s121 = ssub.s32 %s13, 1
        // Predicated region
        $region13: #{tpu_custom_call.1} parent=11 // pred_check
          %p122 = pneg %p60
        $region14: #{tpu_custom_call.1} parent=11 // pred_check_branch
          %124 = sbr.rel (%p122) target = $region16
        $region15: #{tpu_custom_call.1} parent=11 // pred_region
          %s126 = ssub.s32 8192, 8192
          %127 = vsyncadd [#allocation5], %s126
          %s128 = sshll.u32 [#allocation4], 4
          %s129 = int_to_ptr.vmem [resolvable:$true] %s128
          %134 = dma.hbm_to_vmem [thread:$0]  %s1, 8192, %s129, [#allocation5], 128, 128, 8
        $region16: #{tpu_custom_call.1} parent=11 // pred_fallthru
          _
        // Predicated region
        $region17: #{tpu_custom_call.1} parent=11 // pred_check
          %p135 = pneg %p81
        $region18: #{tpu_custom_call.1} parent=11 // pred_check_branch
          %137 = sbr.rel (%p135) target = $region20
        $region19: #{tpu_custom_call.1} parent=11 // pred_region
          _
        $region20: #{tpu_custom_call.1} parent=11 // pred_fallthru
          _
      $region12: #{tpu_custom_call.1} parent=5 // pred_fallthru
        _
      %p138 = scmp.lt.s32.totalorder %s13, 3
      // Predicated region
      $region21: #{tpu_custom_call.1} parent=5 // pred_check
        %p139 = pneg %p138
      $region22: #{tpu_custom_call.1} parent=5 // pred_check_branch
        %141 = sbr.rel (%p139) target = $region24
      $region23: #{tpu_custom_call.1} parent=5 // pred_region
        // Predicated region
        $region25: #{tpu_custom_call.1} parent=23 // pred_check
          %p142 = pneg %p33
        $region26: #{tpu_custom_call.1} parent=23 // pred_check_branch
          %144 = sbr.rel (%p142) target = $region28
        $region27: #{tpu_custom_call.1} parent=23 // pred_region
          %s145 = sand.u32 %s23, 1
          %s146 = scalar_lea.sflag [#allocation3], %s145
          %s147 = sand.u32 %s23, 1
          %s148 = smul.addr %s147, 384
          %s149 = scalar_lea.vmem [#allocation2], %s148
          %s150 = smul.u32 12, %s13
          %s151 = ssub.s32 25, %s150
          %p152 = scmp.lt.s32.totalorder %s151, 12
          %s153 = scalar_select %p152, %s151, 12
          %s154 = smul.u32 128, %s153
          %s155 = smul.u32 %s154, 4
          %s157 = ssub.s32 6144, %s155
          %158 = vsyncadd %s146, %s157
          %p159 = scmp.ne.s32.totalorder 0, %s155
          %s160 = smul.addr %s150, 4
          %s161 = smul.addr %s160, 128
          %s162 = scalar_lea.hbm %s0, %s161
          %s163 = smul.u32 32, %s153
          %s164 = sshll.u32 %s149, 4
          %s165 = int_to_ptr.vmem [resolvable:$true] %s164
          %s166 = sshll.u32 %s163, 4
          %170 = dma.hbm_to_vmem [thread:$0]  (%p159), %s162, %s166, %s165, %s146, 512, 512, 32
        $region28: #{tpu_custom_call.1} parent=23 // pred_fallthru
          _
      $region24: #{tpu_custom_call.1} parent=5 // pred_fallthru
        _
      %p171 = scmp.le.s32.totalorder 1, %s13
      %p172 = scmp.lt.s32.totalorder %s13, 4
      %p173 = pnand %p171, %p172
      %p174 = pneg %p173
      // Predicated region
      $region29: #{tpu_custom_call.1} parent=5 // pred_check
        _
      $region30: #{tpu_custom_call.1} parent=5 // pred_check_branch
        %176 = sbr.rel (%p173) target = $region32
      $region31: #{tpu_custom_call.1} parent=5 // pred_region
        %s177 = ssub.s32 %s13, 1
        %s178 = sand.u32 %s26, 1
        %s179 = scalar_lea.sflag [#allocation3], %s178
        %s180 = sand.u32 %s26, 1
        %s181 = smul.addr %s180, 384
        %s182 = scalar_lea.vmem [#allocation2], %s181
        // Predicated region
        $region33: #{tpu_custom_call.1} parent=31 // pred_check
          %p183 = pneg %p39
        $region34: #{tpu_custom_call.1} parent=31 // pred_check_branch
          %185 = sbr.rel (%p183) target = $region36
        $region35: #{tpu_custom_call.1} parent=31 // pred_region
          %186 = dma.done %s179, 6144
        $region36: #{tpu_custom_call.1} parent=31 // pred_fallthru
          _
        // Predicated region
        $region37: #{tpu_custom_call.1} parent=31 // pred_check
          %p187 = pneg %p60
        $region38: #{tpu_custom_call.1} parent=31 // pred_check_branch
          %189 = sbr.rel (%p187) target = $region40
        $region39: #{tpu_custom_call.1} parent=31 // pred_region
          %190 = dma.done [#allocation5], 8192
        $region40: #{tpu_custom_call.1} parent=31 // pred_fallthru
          _
        %s191 = sand.u32 %s26, 1
        %s192 = scalar_lea.sflag [#allocation3], %s191
        %s193 = sand.u32 %s26, 1
        %s194 = smul.addr %s193, 384
        %s195 = scalar_lea.vmem [#allocation2], %s194
        %p196 = pneg %p39
        %p197 = pneg %p36
        %p198 = pneg %p60
        %p199 = pneg %p57
        %p200 = pneg %p81
        %p201 = pneg %p78
        %p202 = pneg %p107
        %p203 = pneg %p104
        %s204 = sand.u32 %s94, 1
        %s205 = sand.u32 %s94, 1
        %s206 = smul.addr %s205, 96
        %s207 = scalar_lea.vmem [#allocation6], %s206
        %s208 = smul.u32 12, %s18
        %s209 = ssub.s32 25, %s208
        %p210 = scmp.lt.s32.totalorder %s209, 12
        %s211 = scalar_select %p210, %s209, 12
        %s212 = smul.u32 128, %s211
        %s213 = smul.u32 %s212, 4
        %s214 = smul.u32 12, %s18
        %s215 = ssub.s32 25, %s214
        %p216 = scmp.lt.s32.totalorder %s215, 12
        %s217 = scalar_select %p216, %s215, 12
        %s218 = smul.u32 128, %s217
        %v219 = vld [vmem:[%s182] sm:$0xff]
        %v220 = vld [vmem:[%s182 + $0x8] sm:$0xff]
        %v221 = vld [vmem:[%s182 + $0x10] sm:$0xff]
        %v222 = vld [vmem:[%s182 + $0x18] sm:$0xff]
        %v223 = vld [vmem:[%s182 + $0x20] sm:$0xff]
        %v224 = vld [vmem:[%s182 + $0x28] sm:$0xff]
        %v225 = vld [vmem:[%s182 + $0x30] sm:$0xff]
        %v226 = vld [vmem:[%s182 + $0x38] sm:$0xff]
        %v227 = vld [vmem:[%s182 + $0x40] sm:$0xff]
        %v228 = vld [vmem:[%s182 + $0x48] sm:$0xff]
        %v229 = vld [vmem:[%s182 + $0x50] sm:$0xff]
        %v230 = vld [vmem:[%s182 + $0x58] sm:$0xff]
        %v231 = vld [vmem:[%s182 + $0x60] sm:$0xff]
        %v232 = vld [vmem:[%s182 + $0x68] sm:$0xff]
        %v233 = vld [vmem:[%s182 + $0x70] sm:$0xff]
        %v234 = vld [vmem:[%s182 + $0x78] sm:$0xff]
        %v235 = vld [vmem:[%s182 + $0x80] sm:$0xff]
        %v236 = vld [vmem:[%s182 + $0x88] sm:$0xff]
        %v237 = vld [vmem:[%s182 + $0x90] sm:$0xff]
        %v238 = vld [vmem:[%s182 + $0x98] sm:$0xff]
        %v239 = vld [vmem:[%s182 + $0xa0] sm:$0xff]
        %v240 = vld [vmem:[%s182 + $0xa8] sm:$0xff]
        %v241 = vld [vmem:[%s182 + $0xb0] sm:$0xff]
        %v242 = vld [vmem:[%s182 + $0xb8] sm:$0xff]
        %v243 = vld [vmem:[%s182 + $0xc0] sm:$0xff]
        %v244 = vld [vmem:[%s182 + $0xc8] sm:$0xff]
        %v245 = vld [vmem:[%s182 + $0xd0] sm:$0xff]
        %v246 = vld [vmem:[%s182 + $0xd8] sm:$0xff]
        %v247 = vld [vmem:[%s182 + $0xe0] sm:$0xff]
        %v248 = vld [vmem:[%s182 + $0xe8] sm:$0xff]
        %v249 = vld [vmem:[%s182 + $0xf0] sm:$0xff]
        %v250 = vld [vmem:[%s182 + $0xf8] sm:$0xff]
        %v251 = vld [vmem:[%s182 + $0x100] sm:$0xff]
        %v252 = vld [vmem:[%s182 + $0x108] sm:$0xff]
        %v253 = vld [vmem:[%s182 + $0x110] sm:$0xff]
        %v254 = vld [vmem:[%s182 + $0x118] sm:$0xff]
        %v255 = vld [vmem:[%s182 + $0x120] sm:$0xff]
        %v256 = vld [vmem:[%s182 + $0x128] sm:$0xff]
        %v257 = vld [vmem:[%s182 + $0x130] sm:$0xff]
        %v258 = vld [vmem:[%s182 + $0x138] sm:$0xff]
        %v259 = vld [vmem:[%s182 + $0x140] sm:$0xff]
        %v260 = vld [vmem:[%s182 + $0x148] sm:$0xff]
        %v261 = vld [vmem:[%s182 + $0x150] sm:$0xff]
        %v262 = vld [vmem:[%s182 + $0x158] sm:$0xff]
        %v263 = vld [vmem:[%s182 + $0x160] sm:$0xff]
        %v264 = vld [vmem:[%s182 + $0x168] sm:$0xff]
        %v265 = vld [vmem:[%s182 + $0x170] sm:$0xff]
        %v266 = vld [vmem:[%s182 + $0x178] sm:$0xff]
        %v267 = vld [vmem:[#allocation4] sm:$0xff]
        %v268 = vld [vmem:[#allocation4 + $0x8] sm:$0xff]
        %v269 = vld [vmem:[#allocation4 + $0x10] sm:$0xff]
        %v270 = vld [vmem:[#allocation4 + $0x18] sm:$0xff]
        %v271 = vld [vmem:[#allocation4 + $0x20] sm:$0xff]
        %v272 = vld [vmem:[#allocation4 + $0x28] sm:$0xff]
        %v273 = vld [vmem:[#allocation4 + $0x30] sm:$0xff]
        %v274 = vld [vmem:[#allocation4 + $0x38] sm:$0xff]
        %v275 = vld [vmem:[#allocation4 + $0x40] sm:$0xff]
        %v276 = vld [vmem:[#allocation4 + $0x48] sm:$0xff]
        %v277 = vld [vmem:[#allocation4 + $0x50] sm:$0xff]
        %v278 = vld [vmem:[#allocation4 + $0x58] sm:$0xff]
        %v279 = vld [vmem:[#allocation4 + $0x60] sm:$0xff]
        %v280 = vld [vmem:[#allocation4 + $0x68] sm:$0xff]
        %v281 = vld [vmem:[#allocation4 + $0x70] sm:$0xff]
        %v282 = vld [vmem:[#allocation4 + $0x78] sm:$0xff]
        %v283 = vld [vmem:[#allocation4 + $0x80] sm:$0xff]
        %v284 = vld [vmem:[#allocation4 + $0x88] sm:$0xff]
        %v285 = vld [vmem:[#allocation4 + $0x90] sm:$0xff]
        %v286 = vld [vmem:[#allocation4 + $0x98] sm:$0xff]
        %v287 = vld [vmem:[#allocation4 + $0xa0] sm:$0xff]
        %v288 = vld [vmem:[#allocation4 + $0xa8] sm:$0xff]
        %v289 = vld [vmem:[#allocation4 + $0xb0] sm:$0xff]
        %v290 = vld [vmem:[#allocation4 + $0xb8] sm:$0xff]
        %v291 = vld [vmem:[#allocation4 + $0xc0] sm:$0xff]
        %v292 = vld [vmem:[#allocation4 + $0xc8] sm:$0xff]
        %v293 = vld [vmem:[#allocation4 + $0xd0] sm:$0xff]
        %v294 = vld [vmem:[#allocation4 + $0xd8] sm:$0xff]
        %v295 = vld [vmem:[#allocation4 + $0xe0] sm:$0xff]
        %v296 = vld [vmem:[#allocation4 + $0xe8] sm:$0xff]
        %v297 = vld [vmem:[#allocation4 + $0xf0] sm:$0xff]
        %v298 = vld [vmem:[#allocation4 + $0xf8] sm:$0xff]
        %v299 = vld [vmem:[#allocation4 + $0x100] sm:$0xff]
        %v300 = vld [vmem:[#allocation4 + $0x108] sm:$0xff]
        %v301 = vld [vmem:[#allocation4 + $0x110] sm:$0xff]
        %v302 = vld [vmem:[#allocation4 + $0x118] sm:$0xff]
        %v303 = vld [vmem:[#allocation4 + $0x120] sm:$0xff]
        %v304 = vld [vmem:[#allocation4 + $0x128] sm:$0xff]
        %v305 = vld [vmem:[#allocation4 + $0x130] sm:$0xff]
        %v306 = vld [vmem:[#allocation4 + $0x138] sm:$0xff]
        %v307 = vld [vmem:[#allocation4 + $0x140] sm:$0xff]
        %v308 = vld [vmem:[#allocation4 + $0x148] sm:$0xff]
        %v309 = vld [vmem:[#allocation4 + $0x150] sm:$0xff]
        %v310 = vld [vmem:[#allocation4 + $0x158] sm:$0xff]
        %v311 = vld [vmem:[#allocation4 + $0x160] sm:$0xff]
        %v312 = vld [vmem:[#allocation4 + $0x168] sm:$0xff]
        %v313 = vld [vmem:[#allocation4 + $0x170] sm:$0xff]
        %v314 = vld [vmem:[#allocation4 + $0x178] sm:$0xff]
        %v315 = vld [vmem:[#allocation4 + $0x180] sm:$0xff]
        %v316 = vld [vmem:[#allocation4 + $0x188] sm:$0xff]
        %v317 = vld [vmem:[#allocation4 + $0x190] sm:$0xff]
        %v318 = vld [vmem:[#allocation4 + $0x198] sm:$0xff]
        %v319 = vld [vmem:[#allocation4 + $0x1a0] sm:$0xff]
        %v320 = vld [vmem:[#allocation4 + $0x1a8] sm:$0xff]
        %v321 = vld [vmem:[#allocation4 + $0x1b0] sm:$0xff]
        %v322 = vld [vmem:[#allocation4 + $0x1b8] sm:$0xff]
        %v323 = vld [vmem:[#allocation4 + $0x1c0] sm:$0xff]
        %v324 = vld [vmem:[#allocation4 + $0x1c8] sm:$0xff]
        %v325 = vld [vmem:[#allocation4 + $0x1d0] sm:$0xff]
        %v326 = vld [vmem:[#allocation4 + $0x1d8] sm:$0xff]
        %v327 = vld [vmem:[#allocation4 + $0x1e0] sm:$0xff]
        %v328 = vld [vmem:[#allocation4 + $0x1e8] sm:$0xff]
        %v329 = vld [vmem:[#allocation4 + $0x1f0] sm:$0xff]
        %v330 = vld [vmem:[#allocation4 + $0x1f8] sm:$0xff]
        %331 = vmatprep.subr.mxu0 0.0
        %332 = vmatpush1.msra.mxu0 %v267
        %333 = vmatprep.subr.mxu0 0.0
        %334 = vmatpush1.msra.mxu0 %v268
        %335 = vmatprep.subr.mxu0 0.0
        %336 = vmatpush1.msra.mxu0 %v269
        %337 = vmatprep.subr.mxu0 0.0
        %338 = vmatpush1.msra.mxu0 %v270
        %339 = vmatprep.subr.mxu0 0.0
        %340 = vmatpush1.msra.mxu0 %v271
        %341 = vmatprep.subr.mxu0 0.0
        %342 = vmatpush1.msra.mxu0 %v272
        %343 = vmatprep.subr.mxu0 0.0
        %344 = vmatpush1.msra.mxu0 %v273
        %345 = vmatprep.subr.mxu0 0.0
        %346 = vmatpush1.msra.mxu0 %v274
        %347 = vmatprep.subr.mxu0 0.0
        %348 = vmatpush1.msra.mxu0 %v275
        %349 = vmatprep.subr.mxu0 0.0
        %350 = vmatpush1.msra.mxu0 %v276
        %351 = vmatprep.subr.mxu0 0.0
        %352 = vmatpush1.msra.mxu0 %v277
        %353 = vmatprep.subr.mxu0 0.0
        %354 = vmatpush1.msra.mxu0 %v278
        %355 = vmatprep.subr.mxu0 0.0
        %356 = vmatpush1.msra.mxu0 %v279
        %357 = vmatprep.subr.mxu0 0.0
        %358 = vmatpush1.msra.mxu0 %v280
        %359 = vmatprep.subr.mxu0 0.0
        %360 = vmatpush1.msra.mxu0 %v281
        %361 = vmatprep.subr.mxu0 0.0
        %362 = vmatpush1.msra.mxu0 %v282
        %363 = vmatprep.subr.mxu0 0.0
        %364 = vmatpush1.msra.mxu0 %v283
        %365 = vmatprep.subr.mxu0 0.0
        %366 = vmatpush1.msra.mxu0 %v284
        %367 = vmatprep.subr.mxu0 0.0
        %368 = vmatpush1.msra.mxu0 %v285
        %369 = vmatprep.subr.mxu0 0.0
        %370 = vmatpush1.msra.mxu0 %v286
        %371 = vmatprep.subr.mxu0 0.0
        %372 = vmatpush1.msra.mxu0 %v287
        %373 = vmatprep.subr.mxu0 0.0
        %374 = vmatpush1.msra.mxu0 %v288
        %375 = vmatprep.subr.mxu0 0.0
        %376 = vmatpush1.msra.mxu0 %v289
        %377 = vmatprep.subr.mxu0 0.0
        %378 = vmatpush1.msra.mxu0 %v290
        %379 = vmatprep.subr.mxu0 0.0
        %380 = vmatpush1.msra.mxu0 %v291
        %381 = vmatprep.subr.mxu0 0.0
        %382 = vmatpush1.msra.mxu0 %v292
        %383 = vmatprep.subr.mxu0 0.0
        %384 = vmatpush1.msra.mxu0 %v293
        %385 = vmatprep.subr.mxu0 0.0
        %386 = vmatpush1.msra.mxu0 %v294
        %387 = vmatprep.subr.mxu0 0.0
        %388 = vmatpush1.msra.mxu0 %v295
        %389 = vmatprep.subr.mxu0 0.0
        %390 = vmatpush1.msra.mxu0 %v296
        %391 = vmatprep.subr.mxu0 0.0
        %392 = vmatpush1.msra.mxu0 %v297
        %393 = vmatprep.subr.mxu0 0.0
        %394 = vmatpush1.msra.mxu0 %v298
        %395 = vmatprep.mubr.f32.mxu0 %v220
        %396 = vmatmul.mubr.f32.gmra.mrb[0].mxu0 %v219
        %v397 = vpop.f32.mrb[0].mxu0
        %v398 = vadd.f32 0.0, %v397
        %v399 = vpop.f32.mrb[0].mxu0
        %400 = vmatprep.mubr.f32.mxu0 %v224
        %401 = vmatmul.mubr.f32.gmra.mrb[0].mxu0 %v223
        %v402 = vpop.f32.mrb[0].mxu0
        %v403 = vadd.f32 0.0, %v402
        %v404 = vpop.f32.mrb[0].mxu0
        %405 = vmatprep.mubr.f32.mxu0 %v228
        %406 = vmatmul.mubr.f32.gmra.mrb[0].mxu0 %v227
        %v407 = vpop.f32.mrb[0].mxu0
        %v408 = vadd.f32 0.0, %v407
        %v409 = vpop.f32.mrb[0].mxu0
        %410 = vmatprep.mubr.f32.mxu0 %v232
        %411 = vmatmul.mubr.f32.gmra.mrb[0].mxu0 %v231
        %v412 = vpop.f32.mrb[0].mxu0
        %v413 = vadd.f32 0.0, %v412
        %v414 = vpop.f32.mrb[0].mxu0
        %415 = vmatprep.mubr.f32.mxu0 %v236
        %416 = vmatmul.mubr.f32.gmra.mrb[0].mxu0 %v235
        %v417 = vpop.f32.mrb[0].mxu0
        %v418 = vadd.f32 0.0, %v417
        %v419 = vpop.f32.mrb[0].mxu0
        %420 = vmatprep.mubr.f32.mxu0 %v240
        %421 = vmatmul.mubr.f32.gmra.mrb[0].mxu0 %v239
        %v422 = vpop.f32.mrb[0].mxu0
        %v423 = vadd.f32 0.0, %v422
        %v424 = vpop.f32.mrb[0].mxu0
        %425 = vmatprep.mubr.f32.mxu0 %v244
        %426 = vmatmul.mubr.f32.gmra.mrb[0].mxu0 %v243
        %v427 = vpop.f32.mrb[0].mxu0
        %v428 = vadd.f32 0.0, %v427
        %v429 = vpop.f32.mrb[0].mxu0
        %430 = vmatprep.mubr.f32.mxu0 %v248
        %431 = vmatmul.mubr.f32.gmra.mrb[0].mxu0 %v247
        %v432 = vpop.f32.mrb[0].mxu0
        %v433 = vadd.f32 0.0, %v432
        %v434 = vpop.f32.mrb[0].mxu0
        %435 = vmatprep.mubr.f32.mxu0 %v252
        %436 = vmatmul.mubr.f32.gmra.mrb[0].mxu0 %v251
        %v437 = vpop.f32.mrb[0].mxu0
        %v438 = vadd.f32 0.0, %v437
        %v439 = vpop.f32.mrb[0].mxu0
        %440 = vmatprep.mubr.f32.mxu0 %v256
        %441 = vmatmul.mubr.f32.gmra.mrb[0].mxu0 %v255
        %v442 = vpop.f32.mrb[0].mxu0
        %v443 = vadd.f32 0.0, %v442
        %v444 = vpop.f32.mrb[0].mxu0
        %445 = vmatprep.mubr.f32.mxu0 %v260
        %446 = vmatmul.mubr.f32.gmra.mrb[0].mxu0 %v259
        %v447 = vpop.f32.mrb[0].mxu0
        %v448 = vadd.f32 0.0, %v447
        %v449 = vpop.f32.mrb[0].mxu0
        %450 = vmatprep.mubr.f32.mxu0 %v264
        %451 = vmatmul.mubr.f32.gmra.mrb[0].mxu0 %v263
        %v452 = vpop.f32.mrb[0].mxu0
        %v453 = vadd.f32 0.0, %v452
        %v454 = vpop.f32.mrb[0].mxu0
        %455 = vdwg.mxu0
        %456 = vmatprep.subr.mxu0 0.0
        %457 = vmatpush1.msra.mxu0 %v299
        %458 = vmatprep.subr.mxu0 0.0
        %459 = vmatpush1.msra.mxu0 %v300
        %460 = vmatprep.subr.mxu0 0.0
        %461 = vmatpush1.msra.mxu0 %v301
        %462 = vmatprep.subr.mxu0 0.0
        %463 = vmatpush1.msra.mxu0 %v302
        %464 = vmatprep.subr.mxu0 0.0
        %465 = vmatpush1.msra.mxu0 %v303
        %466 = vmatprep.subr.mxu0 0.0
        %467 = vmatpush1.msra.mxu0 %v304
        %468 = vmatprep.subr.mxu0 0.0
        %469 = vmatpush1.msra.mxu0 %v305
        %470 = vmatprep.subr.mxu0 0.0
        %471 = vmatpush1.msra.mxu0 %v306
        %472 = vmatprep.subr.mxu0 0.0
        %473 = vmatpush1.msra.mxu0 %v307
        %474 = vmatprep.subr.mxu0 0.0
        %475 = vmatpush1.msra.mxu0 %v308
        %476 = vmatprep.subr.mxu0 0.0
        %477 = vmatpush1.msra.mxu0 %v309
        %478 = vmatprep.subr.mxu0 0.0
        %479 = vmatpush1.msra.mxu0 %v310
        %480 = vmatprep.subr.mxu0 0.0
        %481 = vmatpush1.msra.mxu0 %v311
        %482 = vmatprep.subr.mxu0 0.0
        %483 = vmatpush1.msra.mxu0 %v312
        %484 = vmatprep.subr.mxu0 0.0
        %485 = vmatpush1.msra.mxu0 %v313
        %486 = vmatprep.subr.mxu0 0.0
        %487 = vmatpush1.msra.mxu0 %v314
        %488 = vmatprep.subr.mxu0 0.0
        %489 = vmatpush1.msra.mxu0 %v315
        %490 = vmatprep.subr.mxu0 0.0
        %491 = vmatpush1.msra.mxu0 %v316
        %492 = vmatprep.subr.mxu0 0.0
        %493 = vmatpush1.msra.mxu0 %v317
        %494 = vmatprep.subr.mxu0 0.0
        %495 = vmatpush1.msra.mxu0 %v318
        %496 = vmatprep.subr.mxu0 0.0
        %497 = vmatpush1.msra.mxu0 %v319
        %498 = vmatprep.subr.mxu0 0.0
        %499 = vmatpush1.msra.mxu0 %v320
        %500 = vmatprep.subr.mxu0 0.0
        %501 = vmatpush1.msra.mxu0 %v321
        %502 = vmatprep.subr.mxu0 0.0
        %503 = vmatpush1.msra.mxu0 %v322
        %504 = vmatprep.subr.mxu0 0.0
        %505 = vmatpush1.msra.mxu0 %v323
        %506 = vmatprep.subr.mxu0 0.0
        %507 = vmatpush1.msra.mxu0 %v324
        %508 = vmatprep.subr.mxu0 0.0
        %509 = vmatpush1.msra.mxu0 %v325
        %510 = vmatprep.subr.mxu0 0.0
        %511 = vmatpush1.msra.mxu0 %v326
        %512 = vmatprep.subr.mxu0 0.0
        %513 = vmatpush1.msra.mxu0 %v327
        %514 = vmatprep.subr.mxu0 0.0
        %515 = vmatpush1.msra.mxu0 %v328
        %516 = vmatprep.subr.mxu0 0.0
        %517 = vmatpush1.msra.mxu0 %v329
        %518 = vmatprep.subr.mxu0 0.0
        %519 = vmatpush1.msra.mxu0 %v330
        %520 = vmatprep.mubr.f32.mxu0 %v222
        %521 = vmatmul.mubr.f32.gmra.mrb[0].mxu0 %v221
        %v522 = vpop.f32.mrb[0].mxu0
        %v523 = vadd.f32 %v398, %v522
        %v524 = vpop.f32.mrb[0].mxu0
        %525 = vmatprep.mubr.f32.mxu0 %v226
        %526 = vmatmul.mubr.f32.gmra.mrb[0].mxu0 %v225
        %v527 = vpop.f32.mrb[0].mxu0
        %v528 = vadd.f32 %v403, %v527
        %v529 = vpop.f32.mrb[0].mxu0
        %530 = vmatprep.mubr.f32.mxu0 %v230
        %531 = vmatmul.mubr.f32.gmra.mrb[0].mxu0 %v229
        %v532 = vpop.f32.mrb[0].mxu0
        %v533 = vadd.f32 %v408, %v532
        %v534 = vpop.f32.mrb[0].mxu0
        %535 = vmatprep.mubr.f32.mxu0 %v234
        %536 = vmatmul.mubr.f32.gmra.mrb[0].mxu0 %v233
        %v537 = vpop.f32.mrb[0].mxu0
        %v538 = vadd.f32 %v413, %v537
        %v539 = vpop.f32.mrb[0].mxu0
        %540 = vmatprep.mubr.f32.mxu0 %v238
        %541 = vmatmul.mubr.f32.gmra.mrb[0].mxu0 %v237
        %v542 = vpop.f32.mrb[0].mxu0
        %v543 = vadd.f32 %v418, %v542
        %v544 = vpop.f32.mrb[0].mxu0
        %545 = vmatprep.mubr.f32.mxu0 %v242
        %546 = vmatmul.mubr.f32.gmra.mrb[0].mxu0 %v241
        %v547 = vpop.f32.mrb[0].mxu0
        %v548 = vadd.f32 %v423, %v547
        %v549 = vpop.f32.mrb[0].mxu0
        %550 = vmatprep.mubr.f32.mxu0 %v246
        %551 = vmatmul.mubr.f32.gmra.mrb[0].mxu0 %v245
        %v552 = vpop.f32.mrb[0].mxu0
        %v553 = vadd.f32 %v428, %v552
        %v554 = vpop.f32.mrb[0].mxu0
        %555 = vmatprep.mubr.f32.mxu0 %v250
        %556 = vmatmul.mubr.f32.gmra.mrb[0].mxu0 %v249
        %v557 = vpop.f32.mrb[0].mxu0
        %v558 = vadd.f32 %v433, %v557
        %v559 = vpop.f32.mrb[0].mxu0
        %560 = vmatprep.mubr.f32.mxu0 %v254
        %561 = vmatmul.mubr.f32.gmra.mrb[0].mxu0 %v253
        %v562 = vpop.f32.mrb[0].mxu0
        %v563 = vadd.f32 %v438, %v562
        %v564 = vpop.f32.mrb[0].mxu0
        %565 = vmatprep.mubr.f32.mxu0 %v258
        %566 = vmatmul.mubr.f32.gmra.mrb[0].mxu0 %v257
        %v567 = vpop.f32.mrb[0].mxu0
        %v568 = vadd.f32 %v443, %v567
        %v569 = vpop.f32.mrb[0].mxu0
        %570 = vmatprep.mubr.f32.mxu0 %v262
        %571 = vmatmul.mubr.f32.gmra.mrb[0].mxu0 %v261
        %v572 = vpop.f32.mrb[0].mxu0
        %v573 = vadd.f32 %v448, %v572
        %v574 = vpop.f32.mrb[0].mxu0
        %575 = vmatprep.mubr.f32.mxu0 %v266
        %576 = vmatmul.mubr.f32.gmra.mrb[0].mxu0 %v265
        %v577 = vpop.f32.mrb[0].mxu0
        %v578 = vadd.f32 %v453, %v577
        %v579 = vpop.f32.mrb[0].mxu0
        %580 = vdwg.mxu0
        %v581 = vld [vmem:[%s2] sm:$0x1]
        %v583 = vlaneseq
        %v584 = vshrl.u32 %v583, 7
        %v585 = vsub.s32 0, %v584
        %v586 = vrot.slane %v581, %v585
        %v588 = vadd.f32 %v523, %v586
        %v589 = vadd.f32 %v528, %v586
        %v590 = vadd.f32 %v533, %v586
        %v591 = vadd.f32 %v538, %v586
        %v592 = vadd.f32 %v543, %v586
        %v593 = vadd.f32 %v548, %v586
        %v594 = vadd.f32 %v553, %v586
        %v595 = vadd.f32 %v558, %v586
        %v596 = vadd.f32 %v563, %v586
        %v597 = vadd.f32 %v568, %v586
        %v598 = vadd.f32 %v573, %v586
        %v599 = vadd.f32 %v578, %v586
        %vm600 = vcmask 80896
        %601 = vst.msk [vmem:[%s207] sm:$0xff] %vm600, %v588
        %602 = vst.msk [vmem:[%s207 + $0x8] sm:$0xff] %vm600, %v589
        %603 = vst.msk [vmem:[%s207 + $0x10] sm:$0xff] %vm600, %v590
        %604 = vst.msk [vmem:[%s207 + $0x18] sm:$0xff] %vm600, %v591
        %605 = vst.msk [vmem:[%s207 + $0x20] sm:$0xff] %vm600, %v592
        %606 = vst.msk [vmem:[%s207 + $0x28] sm:$0xff] %vm600, %v593
        %607 = vst.msk [vmem:[%s207 + $0x30] sm:$0xff] %vm600, %v594
        %608 = vst.msk [vmem:[%s207 + $0x38] sm:$0xff] %vm600, %v595
        %609 = vst.msk [vmem:[%s207 + $0x40] sm:$0xff] %vm600, %v596
        %610 = vst.msk [vmem:[%s207 + $0x48] sm:$0xff] %vm600, %v597
        %611 = vst.msk [vmem:[%s207 + $0x50] sm:$0xff] %vm600, %v598
        %612 = vst.msk [vmem:[%s207 + $0x58] sm:$0xff] %vm600, %v599
        %s613 = sand.u32 %s94, 1
        %s614 = sand.u32 %s94, 1
        %s615 = smul.addr %s614, 96
        %s616 = scalar_lea.vmem [#allocation6], %s615
        // Predicated region
        $region41: #{tpu_custom_call.1} parent=31 // pred_check
          %p617 = pneg %p104
        $region42: #{tpu_custom_call.1} parent=31 // pred_check_branch
          %619 = sbr.rel (%p617) target = $region44
        $region43: #{tpu_custom_call.1} parent=31 // pred_region
          %s620 = smul.u32 12, %s18
          %s621 = ssub.s32 25, %s620
          %p622 = scmp.lt.s32.totalorder %s621, 12
          %s623 = scalar_select %p622, %s621, 12
          %s624 = smul.u32 128, %s623
          %p625 = scmp.ne.s32.totalorder 0, %s624
          %s626 = smul.addr %s620, 8
          %s627 = scalar_lea.vmem %s3, %s626
          // Predicated region
          $region45: #{tpu_custom_call.1} parent=43 // pred_check
            %p628 = pneg %p625
          $region46: #{tpu_custom_call.1} parent=43 // pred_check_branch
            %630 = sbr.rel (%p628) target = $region48
          $region47: #{tpu_custom_call.1} parent=43 // pred_region
            // Predicated region
            $region49: #{tpu_custom_call.1} parent=47 // pred_check
              _
            $region50: #{tpu_custom_call.1} parent=47 // pred_check_branch
              %632 = sbr.rel (0) target = $region52
            $region51: #{tpu_custom_call.1} parent=47 // pred_region
              // Predicated region
              $region71: #{tpu_custom_call.1} parent=51 // pred_check
                _
              $region72: #{tpu_custom_call.1} parent=51 // pred_check_branch
                %704 = sbr.rel (0) target = $region74
              $region73: #{tpu_custom_call.1} parent=51 // pred_region
                %s705 = sdiv.u32.pop %s623, 12
                %s706 = srem.u32.pop %s623, 12
                // While loop
                $region75: #{tpu_custom_call.1} parent=73 // loop_pre_header
                  _
                $region76: #{tpu_custom_call.1} parent=73 // loop_header
                  %s708 = sphi 0, %s710
                  %p709 = scmp.ge.s32.totalorder %s708, %s705
                  %s713 = sphi 0, %s742
                  %s714 = sphi %s616, %s745
                  %s715 = sphi %s627, %s746
                $region77: #{tpu_custom_call.1} parent=73 // loop_header_branch
                  %712 = sbr.rel (%p709) target = $region81
                $region78: #{tpu_custom_call.1} parent=73 // loop_body
                  %v716 = vld [vmem:[%s714] sm:$0xff]
                  %717 = vst [vmem:[%s715] sm:$0xff] %v716
                  %v718 = vld [vmem:[%s714 + $0x8] sm:$0xff]
                  %719 = vst [vmem:[%s715 + $0x8] sm:$0xff] %v718
                  %v720 = vld [vmem:[%s714 + $0x10] sm:$0xff]
                  %721 = vst [vmem:[%s715 + $0x10] sm:$0xff] %v720
                  %v722 = vld [vmem:[%s714 + $0x18] sm:$0xff]
                  %723 = vst [vmem:[%s715 + $0x18] sm:$0xff] %v722
                  %v724 = vld [vmem:[%s714 + $0x20] sm:$0xff]
                  %725 = vst [vmem:[%s715 + $0x20] sm:$0xff] %v724
                  %v726 = vld [vmem:[%s714 + $0x28] sm:$0xff]
                  %727 = vst [vmem:[%s715 + $0x28] sm:$0xff] %v726
                  %v728 = vld [vmem:[%s714 + $0x30] sm:$0xff]
                  %729 = vst [vmem:[%s715 + $0x30] sm:$0xff] %v728
                  %v730 = vld [vmem:[%s714 + $0x38] sm:$0xff]
                  %731 = vst [vmem:[%s715 + $0x38] sm:$0xff] %v730
                  %v732 = vld [vmem:[%s714 + $0x40] sm:$0xff]
                  %733 = vst [vmem:[%s715 + $0x40] sm:$0xff] %v732
                  %v734 = vld [vmem:[%s714 + $0x48] sm:$0xff]
                  %735 = vst [vmem:[%s715 + $0x48] sm:$0xff] %v734
                  %v736 = vld [vmem:[%s714 + $0x50] sm:$0xff]
                  %737 = vst [vmem:[%s715 + $0x50] sm:$0xff] %v736
                  %v738 = vld [vmem:[%s714 + $0x58] sm:$0xff]
                  %739 = vst [vmem:[%s715 + $0x58] sm:$0xff] %v738
                  %s740 = sadd.s32 1, %s713
                  %p741 = scmp.ge.s32.totalorder %s740, %s705
                  %s742 = scalar_select %p741, 0, %s740
                  %s743 = smul.u32 %s742, 96
                  %s744 = smul.u32 %s742, 96
                  %s745 = scalar_lea.vmem %s616, %s743 [#allocation6]
                  %s746 = scalar_lea.vmem %s627, %s744
                $region79: #{tpu_custom_call.1} parent=73 // loop_footer
                  %s710 = sadd.s32 %s708, 1
                $region80: #{tpu_custom_call.1} parent=73 // loop_footer_branch
                  %707 = sbr.rel target = $region76
                $region81: #{tpu_custom_call.1} parent=73 // loop_exit
                  _
                %s747 = sdiv.u32.pop %s623, 12
                %s748 = srem.u32.pop %s623, 12
                %s749 = smul.u32 %s747, 12
                %s750 = smul.u32 8, %s749
                %s751 = scalar_lea.vmem %s616, %s750 [#allocation6]
                %s752 = smul.u32 8, %s749
                %s753 = scalar_lea.vmem %s627, %s752
                // While loop
                $region82: #{tpu_custom_call.1} parent=73 // loop_pre_header
                  _
                $region83: #{tpu_custom_call.1} parent=73 // loop_header
                  %s755 = sphi 0, %s757
                  %p756 = scmp.ge.s32.totalorder %s755, %s748
                  %s760 = sphi 0, %s767
                  %s761 = sphi %s751, %s770
                  %s762 = sphi %s753, %s771
                $region84: #{tpu_custom_call.1} parent=73 // loop_header_branch
                  %759 = sbr.rel (%p756) target = $region88
                $region85: #{tpu_custom_call.1} parent=73 // loop_body
                  %v763 = vld [vmem:[%s761] sm:$0xff]
                  %764 = vst [vmem:[%s762] sm:$0xff] %v763
                  %s765 = sadd.s32 1, %s760
                  %p766 = scmp.ge.s32.totalorder %s765, %s748
                  %s767 = scalar_select %p766, 0, %s765
                  %s768 = smul.u32 %s767, 8
                  %s769 = smul.u32 %s767, 8
                  %s770 = scalar_lea.vmem %s751, %s768 [#allocation6]
                  %s771 = scalar_lea.vmem %s753, %s769
                $region86: #{tpu_custom_call.1} parent=73 // loop_footer
                  %s757 = sadd.s32 %s755, 1
                $region87: #{tpu_custom_call.1} parent=73 // loop_footer_branch
                  %754 = sbr.rel target = $region83
                $region88: #{tpu_custom_call.1} parent=73 // loop_exit
                  _
              $region74: #{tpu_custom_call.1} parent=51 // pred_fallthru
                _
              // Predicated region
              $region89: #{tpu_custom_call.1} parent=51 // pred_check
                _
              $region90: #{tpu_custom_call.1} parent=51 // pred_check_branch
                %773 = sbr.rel target = $region92
              $region91: #{tpu_custom_call.1} parent=51 // pred_region
                _
              $region92: #{tpu_custom_call.1} parent=51 // pred_fallthru
                _
            $region52: #{tpu_custom_call.1} parent=47 // pred_fallthru
              _
            // Predicated region
            $region53: #{tpu_custom_call.1} parent=47 // pred_check
              _
            $region54: #{tpu_custom_call.1} parent=47 // pred_check_branch
              %634 = sbr.rel target = $region56
            $region55: #{tpu_custom_call.1} parent=47 // pred_region
              %s636 = sdiv.u32.pop %s623, 12
              %s637 = srem.u32.pop %s623, 12
              // While loop
              $region57: #{tpu_custom_call.1} parent=55 // loop_pre_header
                _
              $region58: #{tpu_custom_call.1} parent=55 // loop_header
                %s639 = sphi 0, %s641
                %p640 = scmp.ge.s32.totalorder %s639, %s636
                %s644 = sphi 0, %s673
                %s645 = sphi %s616, %s676
                %s646 = sphi %s627, %s677
              $region59: #{tpu_custom_call.1} parent=55 // loop_header_branch
                %643 = sbr.rel (%p640) target = $region63
              $region60: #{tpu_custom_call.1} parent=55 // loop_body
                %v647 = vld [vmem:[%s645] sm:$0xff]
                %648 = vst [vmem:[%s646] sm:$0xff] %v647
                %v649 = vld [vmem:[%s645 + $0x8] sm:$0xff]
                %650 = vst [vmem:[%s646 + $0x8] sm:$0xff] %v649
                %v651 = vld [vmem:[%s645 + $0x10] sm:$0xff]
                %652 = vst [vmem:[%s646 + $0x10] sm:$0xff] %v651
                %v653 = vld [vmem:[%s645 + $0x18] sm:$0xff]
                %654 = vst [vmem:[%s646 + $0x18] sm:$0xff] %v653
                %v655 = vld [vmem:[%s645 + $0x20] sm:$0xff]
                %656 = vst [vmem:[%s646 + $0x20] sm:$0xff] %v655
                %v657 = vld [vmem:[%s645 + $0x28] sm:$0xff]
                %658 = vst [vmem:[%s646 + $0x28] sm:$0xff] %v657
                %v659 = vld [vmem:[%s645 + $0x30] sm:$0xff]
                %660 = vst [vmem:[%s646 + $0x30] sm:$0xff] %v659
                %v661 = vld [vmem:[%s645 + $0x38] sm:$0xff]
                %662 = vst [vmem:[%s646 + $0x38] sm:$0xff] %v661
                %v663 = vld [vmem:[%s645 + $0x40] sm:$0xff]
                %664 = vst [vmem:[%s646 + $0x40] sm:$0xff] %v663
                %v665 = vld [vmem:[%s645 + $0x48] sm:$0xff]
                %666 = vst [vmem:[%s646 + $0x48] sm:$0xff] %v665
                %v667 = vld [vmem:[%s645 + $0x50] sm:$0xff]
                %668 = vst [vmem:[%s646 + $0x50] sm:$0xff] %v667
                %v669 = vld [vmem:[%s645 + $0x58] sm:$0xff]
                %670 = vst [vmem:[%s646 + $0x58] sm:$0xff] %v669
                %s671 = sadd.s32 1, %s644
                %p672 = scmp.ge.s32.totalorder %s671, %s636
                %s673 = scalar_select %p672, 0, %s671
                %s674 = smul.u32 %s673, 96
                %s675 = smul.u32 %s673, 96
                %s676 = scalar_lea.vmem %s616, %s674 [#allocation6]
                %s677 = scalar_lea.vmem %s627, %s675
              $region61: #{tpu_custom_call.1} parent=55 // loop_footer
                %s641 = sadd.s32 %s639, 1
              $region62: #{tpu_custom_call.1} parent=55 // loop_footer_branch
                %638 = sbr.rel target = $region58
              $region63: #{tpu_custom_call.1} parent=55 // loop_exit
                _
              %s678 = sdiv.u32.pop %s623, 12
              %s679 = srem.u32.pop %s623, 12
              %s680 = smul.u32 %s678, 12
              %s681 = smul.u32 8, %s680
              %s682 = scalar_lea.vmem %s616, %s681 [#allocation6]
              %s683 = smul.u32 8, %s680
              %s684 = scalar_lea.vmem %s627, %s683
              // While loop
              $region64: #{tpu_custom_call.1} parent=55 // loop_pre_header
                _
              $region65: #{tpu_custom_call.1} parent=55 // loop_header
                %s686 = sphi 0, %s688
                %p687 = scmp.ge.s32.totalorder %s686, %s679
                %s691 = sphi 0, %s698
                %s692 = sphi %s682, %s701
                %s693 = sphi %s684, %s702
              $region66: #{tpu_custom_call.1} parent=55 // loop_header_branch
                %690 = sbr.rel (%p687) target = $region70
              $region67: #{tpu_custom_call.1} parent=55 // loop_body
                %v694 = vld [vmem:[%s692] sm:$0xff]
                %695 = vst [vmem:[%s693] sm:$0xff] %v694
                %s696 = sadd.s32 1, %s691
                %p697 = scmp.ge.s32.totalorder %s696, %s679
                %s698 = scalar_select %p697, 0, %s696
                %s699 = smul.u32 %s698, 8
                %s700 = smul.u32 %s698, 8
                %s701 = scalar_lea.vmem %s682, %s699 [#allocation6]
                %s702 = scalar_lea.vmem %s684, %s700
              $region68: #{tpu_custom_call.1} parent=55 // loop_footer
                %s688 = sadd.s32 %s686, 1
              $region69: #{tpu_custom_call.1} parent=55 // loop_footer_branch
                %685 = sbr.rel target = $region65
              $region70: #{tpu_custom_call.1} parent=55 // loop_exit
                _
            $region56: #{tpu_custom_call.1} parent=47 // pred_fallthru
              _
          $region48: #{tpu_custom_call.1} parent=43 // pred_fallthru
            _
          %774 = vnop
        $region44: #{tpu_custom_call.1} parent=31 // pred_fallthru
          _
      $region32: #{tpu_custom_call.1} parent=5 // pred_fallthru
        _
      %p775 = scmp.le.s32.totalorder 2, %s13
      // Predicated region
      $region93: #{tpu_custom_call.1} parent=5 // pred_check
        %p776 = pneg %p775
      $region94: #{tpu_custom_call.1} parent=5 // pred_check_branch
        %778 = sbr.rel (%p776) target = $region96
      $region95: #{tpu_custom_call.1} parent=5 // pred_region
        %s779 = ssub.s32 %s13, 2
        // Predicated region
        $region97: #{tpu_custom_call.1} parent=95 // pred_check
          %p780 = pneg %p110
        $region98: #{tpu_custom_call.1} parent=95 // pred_check_branch
          %782 = sbr.rel (%p780) target = $region100
        $region99: #{tpu_custom_call.1} parent=95 // pred_region
          %s783 = sand.u32 %s95, 1
          %s784 = sand.u32 %s95, 1
          %s785 = smul.addr %s784, 96
          %s786 = scalar_lea.vmem [#allocation6], %s785
        $region100: #{tpu_custom_call.1} parent=95 // pred_fallthru
          _
      $region96: #{tpu_custom_call.1} parent=5 // pred_fallthru
        _
    $region6: #{tpu_custom_call.1} parent=1 // loop_footer
      %s17 = sadd.s32 1, %s13
    $region7: #{tpu_custom_call.1} parent=1 // loop_footer_branch
      %12 = sbr.rel target = $region3
    $region8: #{tpu_custom_call.1} parent=1 // loop_exit
      _
    %787 = vsyncpa [#allocation3], 1
    %s788 = scalar_lea.sflag [#allocation3], 1
    %789 = vsyncpa %s788, 1
    %790 = vsyncpa [#allocation5], 1

</llo_original>
